<compile_context>
chip_gen: v7x
topology: tpu7x:2x2x1
jax: 0.10.0
libtpu: 0.0.40
codegen_flags: <defaults>
</compile_context>

<pallas_src>
import math

import jax
import jax.numpy as jnp
from jax import lax
from jax.experimental import pallas as pl
from jax.experimental.pallas import tpu as pltpu


# ---------------------------------------------------------------------------
# DCT filter construction (deterministic parameter init, plain JAX glue —
# mirrors MultiSpectralDCTLayer.get_dct_filter)
# ---------------------------------------------------------------------------
def _build_filter_1d(freq: int, pos_count: int) -> jnp.ndarray:
    """cos(pi * freq * (pos + 0.5) / POS) / sqrt(POS), *sqrt(2) if freq != 0."""
    pos = jnp.arange(pos_count, dtype=jnp.float32)
    result = jnp.cos(jnp.pi * freq * (pos + 0.5) / pos_count) / math.sqrt(pos_count)
    if freq != 0:
        result = result * math.sqrt(2.0)
    return result


def get_dct_filter(height, width, mapper_x, mapper_y, channel) -> jnp.ndarray:
    assert len(mapper_x) == len(mapper_y)
    assert channel % len(mapper_x) == 0
    c_part = channel // len(mapper_x)
    parts = []
    for u_x, v_y in zip(mapper_x, mapper_y):
        fx = _build_filter_1d(u_x, height)            # (H,)
        fy = _build_filter_1d(v_y, width)             # (W,)
        filt = fx[:, None] * fy[None, :]              # (H, W)
        parts.append(jnp.broadcast_to(filt[None], (c_part, height, width)))
    return jnp.concatenate(parts, axis=0)             # (C, H, W)


# ---------------------------------------------------------------------------
# Tiling helpers
# ---------------------------------------------------------------------------
def _vmem_capacity_bytes() -> int:
    try:
        info = pltpu.get_tpu_info()
        cap = getattr(info, "vmem_capacity_bytes", None)
        if cap:
            return int(cap)
    except Exception:
        pass
    return 64 << 20  # conservative fallback (v7x per-TensorCore figure)


def _divisor_tile(total: int, align: int, cap: int):
    """Largest divisor of `total` that is a multiple of `align` and <= cap."""
    if total % align != 0:
        return None
    best = None
    d = align
    limit = min(total, cap)
    while d <= limit:
        if total % d == 0:
            best = d
        d += align
    return best


def _choose_tiles(n, c, hw, x_itemsize, target_x_tile_bytes):
    # Channels = lane dim of every block: multiple of 128 (lane-dense) or full C.
    tc = _divisor_tile(c, 128, 512) or c
    # Batch = sublane dim of the output block: multiple of 8 or full N.
    tn = _divisor_tile(n, 8, 64) or n
    # HW (reduction) rows per block: as many as fit the per-step x-tile target.
    max_thw = max(8, target_x_tile_bytes // max(1, tn * tc * x_itemsize))
    thw = _divisor_tile(hw, 8, max_thw) or hw
    # Safety: full-extent fallbacks above can overshoot the budget; shrink
    # tn / tc while keeping divisibility and (8, 128) alignment.
    while tn * thw * tc * x_itemsize > 2 * target_x_tile_bytes and tn % 16 == 0:
        tn //= 2
    while tn * thw * tc * x_itemsize > 2 * target_x_tile_bytes and tc % 256 == 0:
        tc //= 2
    return tn, tc, thw


def _choose_slab(thw, tn, tc, budget_bytes=2 << 20):
    """Sublane-aligned chunk of the HW axis accumulated per VPU step (also the
    sublane extent of the f32 accumulator).  Full thw when it cannot split."""
    if thw % 8 != 0:
        return thw
    row_bytes = tn * tc * 4
    best = 8
    d = 8
    while d <= thw:
        if thw % d == 0 and d * row_bytes <= budget_bytes:
            best = d
        d += 8
    return best


# ---------------------------------------------------------------------------
# Pallas kernel: channels-last DCT pooling with VPU-accumulated reduction
# ---------------------------------------------------------------------------
def _make_dct_pool_kernel(n_slabs: int, sub: int):
    def kernel(x_ref, w_ref, o_ref, acc_ref):
        # x_ref:   (tn, thw, tc)   bf16/f32, channels on lanes
        # w_ref:   (thw, tc)       f32 (pre-cast once in the wrapper)
        # o_ref:   (tn, tc)        out dtype, lane-dense store
        # acc_ref: (tn, sub, tc)   f32 scratch, persists across HW grid steps
        @pl.when(pl.program_id(2) == 0)
        def _init():
            acc_ref[...] = jnp.zeros_like(acc_ref)

        if n_slabs == 1:
            # Single slab: one fused multiply-accumulate over the whole block.
            acc_ref[...] += x_ref[...].astype(jnp.float32) * w_ref[...]
        else:
            def slab(s, carry):
                off = pl.multiple_of(s * sub, sub)
                xs = x_ref[:, pl.ds(off, sub), :].astype(jnp.float32)
                ws = w_ref[pl.ds(off, sub), :]
                acc_ref[...] += xs * ws          # pure VPU accumulate
                return carry

            lax.fori_loop(0, n_slabs, slab, 0, unroll=n_slabs <= 8)

        @pl.when(pl.program_id(2) == pl.num_programs(2) - 1)
        def _finalize():
            # Single cross-sublane reduce per output tile (off the hot loop).
            o_ref[...] = jnp.sum(acc_ref[...], axis=1).astype(o_ref.dtype)

    return kernel


def _dct_pool_nlc(x_nlc, w_lc, out_dtype):
    """x_nlc: (N, HW, C), w_lc: (HW, C) f32 -> (N, C)."""
    n, hw, c = x_nlc.shape
    assert w_lc.shape == (hw, c)
    x_itemsize = jnp.dtype(x_nlc.dtype).itemsize
    out_itemsize = jnp.dtype(out_dtype).itemsize

    vmem_cap = _vmem_capacity_bytes()
    # ~1/4 of per-core VMEM per x step (double-buffered), capped at 16 MiB:
    # amortizes the ~0.35 us per-grid-step overhead on all generations while
    # leaving ample headroom (v7x: 64 MiB, v5e/v6e: 128 MiB).
    target_x_tile = int(min(max(vmem_cap // 4, 2 << 20), 16 << 20))

    tn, tc, thw = _choose_tiles(n, c, hw, x_itemsize, target_x_tile)
    sub = _choose_slab(thw, tn, tc)
    n_slabs = thw // sub
    n_tiles, c_tiles, hw_tiles = n // tn, c // tc, hw // thw

    # Bigger parallel axis leads the grid (megacore always has work to split);
    # HW (reduction) stays innermost so the scratch-accumulator pattern is
    # valid and the weight block is resident across the inner loop when
    # hw_tiles == 1 (the common FcaNet case).
    if c_tiles >= n_tiles:
        grid = (c_tiles, n_tiles, hw_tiles)
        x_map = lambda ci, ni, si: (ni, si, ci)
        w_map = lambda ci, ni, si: (si, ci)
        o_map = lambda ci, ni, si: (ni, ci)
    else:
        grid = (n_tiles, c_tiles, hw_tiles)
        x_map = lambda ni, ci, si: (ni, si, ci)
        w_map = lambda ni, ci, si: (si, ci)
        o_map = lambda ni, ci, si: (ni, ci)

    # VMEM budget: double-buffered tiles + f32 accumulator + product temporary
    # (~= accumulator size) + slack, capped with headroom below the physical
    # per-core capacity.
    x_tile_bytes = tn * thw * tc * x_itemsize
    w_tile_bytes = thw * tc * 4
    o_tile_bytes = tn * tc * out_itemsize
    acc_bytes = tn * sub * tc * 4
    needed = 2 * (x_tile_bytes + w_tile_bytes + o_tile_bytes) + 2 * acc_bytes + (2 << 20)
    vmem_limit = int(min(max(needed, 32 << 20), (vmem_cap * 4) // 5))

    return pl.pallas_call(
        _make_dct_pool_kernel(n_slabs, sub),
        out_shape=jax.ShapeDtypeStruct((n, c), out_dtype),
        grid_spec=pltpu.PrefetchScalarGridSpec(
            num_scalar_prefetch=0,
            grid=grid,
            in_specs=[
                pl.BlockSpec((tn, thw, tc), x_map),
                pl.BlockSpec((thw, tc), w_map),
            ],
            out_specs=pl.BlockSpec((tn, tc), o_map),
            scratch_shapes=[pltpu.VMEM((tn, sub, tc), jnp.float32)],
        ),
        compiler_params=pltpu.CompilerParams(
            dimension_semantics=("parallel", "parallel", "arbitrary"),
            vmem_limit_bytes=vmem_limit,
        ),
    )(x_nlc, w_lc)


def multi_spectral_dct_layer(x, weight, *, transfer_dtype="auto", channels_last=False):
    """FcaNet MultiSpectralDCTLayer forward: sum(x * weight, spatial) -> (N, C).

    x:       (N, C, H, W) by default, or (N, H, W, C) with channels_last=True
             (preferred on TPU: skips the relayout pass in front of the kernel).
    weight:  (C, H, W) DCT filter bank (see get_dct_filter).
    transfer_dtype: HBM transfer dtype for x. "auto" (default) casts float32
             inputs to bfloat16 (~2x less HBM traffic; this quantizes x before
             the multiply — accumulation stays f32 in-kernel).  Pass None for
             bit-exact f32 transfer.
    """
    assert x.ndim == 4, f"x must be 4 dimensions, got {x.ndim}"
    if channels_last:
        n, h, w_sp, c = x.shape
        x_nlc = x.reshape(n, h * w_sp, c)
    else:
        n, c, h, w_sp = x.shape
        # NCHW -> (N, HW, C): one relayout pass in XLA, fused with the bf16
        # cast below.  Prefer channels_last=True inputs to avoid it entirely.
        x_nlc = jnp.transpose(x, (0, 2, 3, 1)).reshape(n, h * w_sp, c)
    assert weight.shape == (c, h, w_sp)

    out_dtype = jnp.promote_types(x.dtype, weight.dtype)
    if transfer_dtype == "auto":
        transfer_dtype = jnp.bfloat16 if x.dtype == jnp.float32 else None
    if transfer_dtype is not None:
        x_nlc = x_nlc.astype(transfer_dtype)

    # Weight is tiny and resident across the inner loop: keep it f32 so the
    # kernel never re-casts it per step.
    w_lc = jnp.transpose(weight, (1, 2, 0)).reshape(h * w_sp, c).astype(jnp.float32)

    return _dct_pool_nlc(x_nlc, w_lc, out_dtype)


# ---------------------------------------------------------------------------
# Demo / correctness check
# ---------------------------------------------------------------------------
if __name__ == "__main__":
    # Module config (small, consistent with the PyTorch __init__):
    #   height = width = 16, channel = 4, num_freq = 2 -> c_part = 2
    height, width, channel = 16, 16, 4
    mapper_x = [0, 1]
    mapper_y = [0, 2]

    weight = get_dct_filter(height, width, mapper_x, mapper_y, channel)  # (4,16,16)

    key = jax.random.PRNGKey(0)
    x = jax.random.normal(key, (2, channel, height, width), dtype=jnp.float32)

    # Pure-JAX reference of the PyTorch forward.
    ref = jnp.sum(x * weight[None], axis=(2, 3))

    # Default path: bf16 HBM transfer of x, f32 accumulation in-kernel.
    out_bf16 = jax.block_until_ready(multi_spectral_dct_layer(x, weight))
    assert out_bf16.shape == (2, channel)
    assert jnp.allclose(out_bf16, ref, atol=5e-2, rtol=5e-2), (out_bf16, ref)

    # Exact path: f32 transfer, bit-accurate against the reference.
    out_f32 = jax.block_until_ready(
        multi_spectral_dct_layer(x, weight, transfer_dtype=None))
    assert out_f32.shape == (2, channel)
    assert jnp.allclose(out_f32, ref, atol=1e-5, rtol=1e-5), (out_f32, ref)

    print("KERNEL_OK")
</pallas_src>

<mosaic_0001>
module attributes {stable_mosaic.version = 11 : i64} {
  func.func @kernel(%arg0: i32, %arg1: i32, %arg2: i32, %arg3: memref<2x256x4xbf16, #tpu.memory_space<vmem>>, %arg4: memref<256x4xf32, #tpu.memory_space<vmem>>, %arg5: memref<2x4xf32, #tpu.memory_space<vmem>>, %arg6: memref<2x256x4xf32, #tpu.memory_space<vmem>>) attributes {dimension_semantics = [#tpu.dimension_semantics<parallel>, #tpu.dimension_semantics<parallel>, #tpu.dimension_semantics<arbitrary>], iteration_bounds = array<i64: 1, 1, 1>, scalar_prefetch = 0 : i64, scratch_operands = 1 : i64, tpu.core_type = #tpu.core_type<tc>, window_params = [{transform_indices = @transform_0, window_bounds = array<i64: 2, 256, 4>}, {transform_indices = @transform_1, window_bounds = array<i64: 256, 4>}, {transform_indices = @transform_2, window_bounds = array<i64: 2, 4>}]} {
    %c0_i32 = arith.constant 0 : i32
    %0 = arith.cmpi eq, %arg2, %c0_i32 : i32
    %1 = arith.extui %0 : i1 to i32
    %c0_i32_0 = arith.constant 0 : i32
    %2 = arith.cmpi ne, %1, %c0_i32_0 : i32
    scf.if %2 {
      %cst = arith.constant 0.000000e+00 : f32
      %15 = vector.broadcast %cst : f32 to vector<2x256x4xf32>
      %c0_13 = arith.constant 0 : index
      %c0_14 = arith.constant 0 : index
      %c0_15 = arith.constant 0 : index
      %16 = vector.load %arg6[%c0_13, %c0_14, %c0_15] : memref<2x256x4xf32, #tpu.memory_space<vmem>>, vector<2x256x4xf32>
      tpu.vector_store %arg6[%c0_13, %c0_14, %c0_15], %15 {strides = array<i32>} : memref<2x256x4xf32, #tpu.memory_space<vmem>>, vector<2x256x4xf32>,
    } else {
    }
    %c0 = arith.constant 0 : index
    %c0_1 = arith.constant 0 : index
    %c0_2 = arith.constant 0 : index
    %3 = vector.load %arg6[%c0, %c0_1, %c0_2] : memref<2x256x4xf32, #tpu.memory_space<vmem>>, vector<2x256x4xf32>
    %c0_3 = arith.constant 0 : index
    %c0_4 = arith.constant 0 : index
    %c0_5 = arith.constant 0 : index
    %4 = vector.load %arg3[%c0_3, %c0_4, %c0_5] : memref<2x256x4xbf16, #tpu.memory_space<vmem>>, vector<2x256x4xbf16>
    %5 = arith.extf %4 : vector<2x256x4xbf16> to vector<2x256x4xf32>
    %c0_6 = arith.constant 0 : index
    %c0_7 = arith.constant 0 : index
    %6 = vector.load %arg4[%c0_6, %c0_7] : memref<256x4xf32, #tpu.memory_space<vmem>>, vector<256x4xf32>
    %7 = vector.shape_cast %6 : vector<256x4xf32> to vector<1x256x4xf32>
    %8 = vector.broadcast %7 : vector<1x256x4xf32> to vector<2x256x4xf32>
    %9 = arith.mulf %5, %8 : vector<2x256x4xf32>
    %10 = arith.addf %3, %9 : vector<2x256x4xf32>
    %c0_8 = arith.constant 0 : index
    %c0_9 = arith.constant 0 : index
    %c0_10 = arith.constant 0 : index
    %11 = vector.load %arg6[%c0_8, %c0_9, %c0_10] : memref<2x256x4xf32, #tpu.memory_space<vmem>>, vector<2x256x4xf32>
    tpu.vector_store %arg6[%c0_8, %c0_9, %c0_10], %10 {strides = array<i32>} : memref<2x256x4xf32, #tpu.memory_space<vmem>>, vector<2x256x4xf32>,
    %c0_i32_11 = arith.constant 0 : i32
    %12 = arith.cmpi eq, %arg2, %c0_i32_11 : i32
    %13 = arith.extui %12 : i1 to i32
    %c0_i32_12 = arith.constant 0 : i32
    %14 = arith.cmpi ne, %13, %c0_i32_12 : i32
    scf.if %14 {
      %c0_13 = arith.constant 0 : index
      %c0_14 = arith.constant 0 : index
      %c0_15 = arith.constant 0 : index
      %15 = vector.load %arg6[%c0_13, %c0_14, %c0_15] : memref<2x256x4xf32, #tpu.memory_space<vmem>>, vector<2x256x4xf32>
      %cst = arith.constant dense<0.000000e+00> : vector<2x4xf32>
      %16 = vector.multi_reduction <add>, %15, %cst [1] : vector<2x256x4xf32> to vector<2x4xf32>
      %c0_16 = arith.constant 0 : index
      %c0_17 = arith.constant 0 : index
      %17 = vector.load %arg5[%c0_16, %c0_17] : memref<2x4xf32, #tpu.memory_space<vmem>>, vector<2x4xf32>
      tpu.vector_store %arg5[%c0_16, %c0_17], %16 {strides = array<i32>} : memref<2x4xf32, #tpu.memory_space<vmem>>, vector<2x4xf32>,
    } else {
    }
    return
  }
  func.func @transform_0(%arg0: i32, %arg1: i32, %arg2: i32) -> (i32, i32, i32) {
    %c0_i32 = arith.constant 0 : i32
    return %arg1, %arg2, %arg0 : i32, i32, i32
  }
  func.func @transform_1(%arg0: i32, %arg1: i32, %arg2: i32) -> (i32, i32) {
    %c0_i32 = arith.constant 0 : i32
    return %arg2, %arg0 : i32, i32
  }
  func.func @transform_2(%arg0: i32, %arg1: i32, %arg2: i32) -> (i32, i32) {
    %c0_i32 = arith.constant 0 : i32
    return %arg1, %arg0 : i32, i32
  }
}

</mosaic_0001>

<llo_original>
// kernel: tpu_custom_call.1
$region0: #{tpu_custom_call.1}
  #allocation0 [shape = 'u32[]', space=smem, size = 0x4, offset = 0x4, fixed_abs, tag = 'smem constant byte address 0x4 - core index']
  #allocation1 [shape = 'u32[144,128]{1,0:T(1,128)}', space=vmem, size = 0x12000, scoped, tag = 'internal scratch']
  #allocation2 [shape = 'f32[2,256,4]{2,1,0:T(8,128)}', space=vmem, size = 0x40000, scoped, tag = 'scratch operand']
  %s0 = inlined_call_operand.vmem [shape: bf16[2,256,4], index: 0, kind: input, shape index: {}]
  %s1 = inlined_call_operand.vmem [shape: f32[256,4], index: 1, kind: input, shape index: {}]
  %s2 = inlined_call_operand.hbm [shape: f32[2,4], index: 2, kind: output, shape index: {}]
  %s3 = sld [smem:[#allocation0]]
  $region26: #{tpu_custom_call.1} parent=0
    _
  %s5 = ssub.s32 1, %s3
  %s6 = scalar_select 0, %s5, %s3
  $region1: #{tpu_custom_call.1} parent=0
    #allocation3 [shape = 'u8[1024]{0}', space=vmem, size = 0x400, scoped, tag = 'output window, operand 0, single buffered']
    #allocation4 [shape = 's32[1]{0}', space=sflag, size = 0x4, scoped, tag = 'scoped memory for tpu_custom_call.1']
    %7 = vsyncpa [#allocation4], 0
    // Predicated region
    $region2: #{tpu_custom_call.1} parent=1 // pred_check
      _
    $region3: #{tpu_custom_call.1} parent=1 // pred_check_branch
      %9 = sbr.rel (0) target = $region5
    $region4: #{tpu_custom_call.1} parent=1 // pred_region
      _
    $region5: #{tpu_custom_call.1} parent=1 // pred_fallthru
      _
    // Predicated region
    $region6: #{tpu_custom_call.1} parent=1 // pred_check
      _
    $region7: #{tpu_custom_call.1} parent=1 // pred_check_branch
      %11 = sbr.rel (0) target = $region9
    $region8: #{tpu_custom_call.1} parent=1 // pred_region
      _
    $region9: #{tpu_custom_call.1} parent=1 // pred_fallthru
      _
    %p12 = scmp.eq.s32.totalorder 0, 0
    // Predicated region
    $region10: #{tpu_custom_call.1} parent=1 // pred_check
      %p13 = pneg %p12
    $region11: #{tpu_custom_call.1} parent=1 // pred_check_branch
      %15 = sbr.rel (%p13) target = $region13
    $region12: #{tpu_custom_call.1} parent=1 // pred_region
      %vm16 = vcmask 31744
      %17 = vst.msk [vmem:[#allocation2] sm:$0xff] %vm16, 0.0
      %18 = vst.msk [vmem:[#allocation2 + $0x8] sm:$0xff] %vm16, 0.0
      %19 = vst.msk [vmem:[#allocation2 + $0x10] sm:$0xff] %vm16, 0.0
      %20 = vst.msk [vmem:[#allocation2 + $0x18] sm:$0xff] %vm16, 0.0
      %21 = vst.msk [vmem:[#allocation2 + $0x20] sm:$0xff] %vm16, 0.0
      %22 = vst.msk [vmem:[#allocation2 + $0x28] sm:$0xff] %vm16, 0.0
      %23 = vst.msk [vmem:[#allocation2 + $0x30] sm:$0xff] %vm16, 0.0
      %24 = vst.msk [vmem:[#allocation2 + $0x38] sm:$0xff] %vm16, 0.0
      %25 = vst.msk [vmem:[#allocation2 + $0x40] sm:$0xff] %vm16, 0.0
      %26 = vst.msk [vmem:[#allocation2 + $0x48] sm:$0xff] %vm16, 0.0
      %27 = vst.msk [vmem:[#allocation2 + $0x50] sm:$0xff] %vm16, 0.0
      %28 = vst.msk [vmem:[#allocation2 + $0x58] sm:$0xff] %vm16, 0.0
      %29 = vst.msk [vmem:[#allocation2 + $0x60] sm:$0xff] %vm16, 0.0
      %30 = vst.msk [vmem:[#allocation2 + $0x68] sm:$0xff] %vm16, 0.0
      %31 = vst.msk [vmem:[#allocation2 + $0x70] sm:$0xff] %vm16, 0.0
      %32 = vst.msk [vmem:[#allocation2 + $0x78] sm:$0xff] %vm16, 0.0
      %33 = vst.msk [vmem:[#allocation2 + $0x80] sm:$0xff] %vm16, 0.0
      %34 = vst.msk [vmem:[#allocation2 + $0x88] sm:$0xff] %vm16, 0.0
      %35 = vst.msk [vmem:[#allocation2 + $0x90] sm:$0xff] %vm16, 0.0
      %36 = vst.msk [vmem:[#allocation2 + $0x98] sm:$0xff] %vm16, 0.0
      %37 = vst.msk [vmem:[#allocation2 + $0xa0] sm:$0xff] %vm16, 0.0
      %38 = vst.msk [vmem:[#allocation2 + $0xa8] sm:$0xff] %vm16, 0.0
      %39 = vst.msk [vmem:[#allocation2 + $0xb0] sm:$0xff] %vm16, 0.0
      %40 = vst.msk [vmem:[#allocation2 + $0xb8] sm:$0xff] %vm16, 0.0
      %41 = vst.msk [vmem:[#allocation2 + $0xc0] sm:$0xff] %vm16, 0.0
      %42 = vst.msk [vmem:[#allocation2 + $0xc8] sm:$0xff] %vm16, 0.0
      %43 = vst.msk [vmem:[#allocation2 + $0xd0] sm:$0xff] %vm16, 0.0
      %44 = vst.msk [vmem:[#allocation2 + $0xd8] sm:$0xff] %vm16, 0.0
      %45 = vst.msk [vmem:[#allocation2 + $0xe0] sm:$0xff] %vm16, 0.0
      %46 = vst.msk [vmem:[#allocation2 + $0xe8] sm:$0xff] %vm16, 0.0
      %47 = vst.msk [vmem:[#allocation2 + $0xf0] sm:$0xff] %vm16, 0.0
      %48 = vst.msk [vmem:[#allocation2 + $0xf8] sm:$0xff] %vm16, 0.0
      %49 = vst.msk [vmem:[#allocation2 + $0x100] sm:$0xff] %vm16, 0.0
      %50 = vst.msk [vmem:[#allocation2 + $0x108] sm:$0xff] %vm16, 0.0
      %51 = vst.msk [vmem:[#allocation2 + $0x110] sm:$0xff] %vm16, 0.0
      %52 = vst.msk [vmem:[#allocation2 + $0x118] sm:$0xff] %vm16, 0.0
      %53 = vst.msk [vmem:[#allocation2 + $0x120] sm:$0xff] %vm16, 0.0
      %54 = vst.msk [vmem:[#allocation2 + $0x128] sm:$0xff] %vm16, 0.0
      %55 = vst.msk [vmem:[#allocation2 + $0x130] sm:$0xff] %vm16, 0.0
      %56 = vst.msk [vmem:[#allocation2 + $0x138] sm:$0xff] %vm16, 0.0
      %57 = vst.msk [vmem:[#allocation2 + $0x140] sm:$0xff] %vm16, 0.0
      %58 = vst.msk [vmem:[#allocation2 + $0x148] sm:$0xff] %vm16, 0.0
      %59 = vst.msk [vmem:[#allocation2 + $0x150] sm:$0xff] %vm16, 0.0
      %60 = vst.msk [vmem:[#allocation2 + $0x158] sm:$0xff] %vm16, 0.0
      %61 = vst.msk [vmem:[#allocation2 + $0x160] sm:$0xff] %vm16, 0.0
      %62 = vst.msk [vmem:[#allocation2 + $0x168] sm:$0xff] %vm16, 0.0
      %63 = vst.msk [vmem:[#allocation2 + $0x170] sm:$0xff] %vm16, 0.0
      %64 = vst.msk [vmem:[#allocation2 + $0x178] sm:$0xff] %vm16, 0.0
      %65 = vst.msk [vmem:[#allocation2 + $0x180] sm:$0xff] %vm16, 0.0
      %66 = vst.msk [vmem:[#allocation2 + $0x188] sm:$0xff] %vm16, 0.0
      %67 = vst.msk [vmem:[#allocation2 + $0x190] sm:$0xff] %vm16, 0.0
      %68 = vst.msk [vmem:[#allocation2 + $0x198] sm:$0xff] %vm16, 0.0
      %69 = vst.msk [vmem:[#allocation2 + $0x1a0] sm:$0xff] %vm16, 0.0
      %70 = vst.msk [vmem:[#allocation2 + $0x1a8] sm:$0xff] %vm16, 0.0
      %71 = vst.msk [vmem:[#allocation2 + $0x1b0] sm:$0xff] %vm16, 0.0
      %72 = vst.msk [vmem:[#allocation2 + $0x1b8] sm:$0xff] %vm16, 0.0
      %73 = vst.msk [vmem:[#allocation2 + $0x1c0] sm:$0xff] %vm16, 0.0
      %74 = vst.msk [vmem:[#allocation2 + $0x1c8] sm:$0xff] %vm16, 0.0
      %75 = vst.msk [vmem:[#allocation2 + $0x1d0] sm:$0xff] %vm16, 0.0
      %76 = vst.msk [vmem:[#allocation2 + $0x1d8] sm:$0xff] %vm16, 0.0
      %77 = vst.msk [vmem:[#allocation2 + $0x1e0] sm:$0xff] %vm16, 0.0
      %78 = vst.msk [vmem:[#allocation2 + $0x1e8] sm:$0xff] %vm16, 0.0
      %79 = vst.msk [vmem:[#allocation2 + $0x1f0] sm:$0xff] %vm16, 0.0
      %80 = vst.msk [vmem:[#allocation2 + $0x1f8] sm:$0xff] %vm16, 0.0
    $region13: #{tpu_custom_call.1} parent=1 // pred_fallthru
      _
    %v81 = vld [vmem:[#allocation2] sm:$0xff]
    %v82 = vld [vmem:[#allocation2 + $0x8] sm:$0xff]
    %v83 = vld [vmem:[#allocation2 + $0x10] sm:$0xff]
    %v84 = vld [vmem:[#allocation2 + $0x18] sm:$0xff]
    %v85 = vld [vmem:[#allocation2 + $0x20] sm:$0xff]
    %v86 = vld [vmem:[#allocation2 + $0x28] sm:$0xff]
    %v87 = vld [vmem:[#allocation2 + $0x30] sm:$0xff]
    %v88 = vld [vmem:[#allocation2 + $0x38] sm:$0xff]
    %v89 = vld [vmem:[#allocation2 + $0x40] sm:$0xff]
    %v90 = vld [vmem:[#allocation2 + $0x48] sm:$0xff]
    %v91 = vld [vmem:[#allocation2 + $0x50] sm:$0xff]
    %v92 = vld [vmem:[#allocation2 + $0x58] sm:$0xff]
    %v93 = vld [vmem:[#allocation2 + $0x60] sm:$0xff]
    %v94 = vld [vmem:[#allocation2 + $0x68] sm:$0xff]
    %v95 = vld [vmem:[#allocation2 + $0x70] sm:$0xff]
    %v96 = vld [vmem:[#allocation2 + $0x78] sm:$0xff]
    %v97 = vld [vmem:[#allocation2 + $0x80] sm:$0xff]
    %v98 = vld [vmem:[#allocation2 + $0x88] sm:$0xff]
    %v99 = vld [vmem:[#allocation2 + $0x90] sm:$0xff]
    %v100 = vld [vmem:[#allocation2 + $0x98] sm:$0xff]
    %v101 = vld [vmem:[#allocation2 + $0xa0] sm:$0xff]
    %v102 = vld [vmem:[#allocation2 + $0xa8] sm:$0xff]
    %v103 = vld [vmem:[#allocation2 + $0xb0] sm:$0xff]
    %v104 = vld [vmem:[#allocation2 + $0xb8] sm:$0xff]
    %v105 = vld [vmem:[#allocation2 + $0xc0] sm:$0xff]
    %v106 = vld [vmem:[#allocation2 + $0xc8] sm:$0xff]
    %v107 = vld [vmem:[#allocation2 + $0xd0] sm:$0xff]
    %v108 = vld [vmem:[#allocation2 + $0xd8] sm:$0xff]
    %v109 = vld [vmem:[#allocation2 + $0xe0] sm:$0xff]
    %v110 = vld [vmem:[#allocation2 + $0xe8] sm:$0xff]
    %v111 = vld [vmem:[#allocation2 + $0xf0] sm:$0xff]
    %v112 = vld [vmem:[#allocation2 + $0xf8] sm:$0xff]
    %v113 = vld [vmem:[#allocation2 + $0x100] sm:$0xff]
    %v114 = vld [vmem:[#allocation2 + $0x108] sm:$0xff]
    %v115 = vld [vmem:[#allocation2 + $0x110] sm:$0xff]
    %v116 = vld [vmem:[#allocation2 + $0x118] sm:$0xff]
    %v117 = vld [vmem:[#allocation2 + $0x120] sm:$0xff]
    %v118 = vld [vmem:[#allocation2 + $0x128] sm:$0xff]
    %v119 = vld [vmem:[#allocation2 + $0x130] sm:$0xff]
    %v120 = vld [vmem:[#allocation2 + $0x138] sm:$0xff]
    %v121 = vld [vmem:[#allocation2 + $0x140] sm:$0xff]
    %v122 = vld [vmem:[#allocation2 + $0x148] sm:$0xff]
    %v123 = vld [vmem:[#allocation2 + $0x150] sm:$0xff]
    %v124 = vld [vmem:[#allocation2 + $0x158] sm:$0xff]
    %v125 = vld [vmem:[#allocation2 + $0x160] sm:$0xff]
    %v126 = vld [vmem:[#allocation2 + $0x168] sm:$0xff]
    %v127 = vld [vmem:[#allocation2 + $0x170] sm:$0xff]
    %v128 = vld [vmem:[#allocation2 + $0x178] sm:$0xff]
    %v129 = vld [vmem:[#allocation2 + $0x180] sm:$0xff]
    %v130 = vld [vmem:[#allocation2 + $0x188] sm:$0xff]
    %v131 = vld [vmem:[#allocation2 + $0x190] sm:$0xff]
    %v132 = vld [vmem:[#allocation2 + $0x198] sm:$0xff]
    %v133 = vld [vmem:[#allocation2 + $0x1a0] sm:$0xff]
    %v134 = vld [vmem:[#allocation2 + $0x1a8] sm:$0xff]
    %v135 = vld [vmem:[#allocation2 + $0x1b0] sm:$0xff]
    %v136 = vld [vmem:[#allocation2 + $0x1b8] sm:$0xff]
    %v137 = vld [vmem:[#allocation2 + $0x1c0] sm:$0xff]
    %v138 = vld [vmem:[#allocation2 + $0x1c8] sm:$0xff]
    %v139 = vld [vmem:[#allocation2 + $0x1d0] sm:$0xff]
    %v140 = vld [vmem:[#allocation2 + $0x1d8] sm:$0xff]
    %v141 = vld [vmem:[#allocation2 + $0x1e0] sm:$0xff]
    %v142 = vld [vmem:[#allocation2 + $0x1e8] sm:$0xff]
    %v143 = vld [vmem:[#allocation2 + $0x1f0] sm:$0xff]
    %v144 = vld [vmem:[#allocation2 + $0x1f8] sm:$0xff]
    %v145 = vld [vmem:[%s0] sm:$0xf]
    %v146 = vld [vmem:[%s0 + $0x4] sm:$0xf]
    %v147 = vld [vmem:[%s0 + $0x8] sm:$0xf]
    %v148 = vld [vmem:[%s0 + $0xc] sm:$0xf]
    %v149 = vld [vmem:[%s0 + $0x10] sm:$0xf]
    %v150 = vld [vmem:[%s0 + $0x14] sm:$0xf]
    %v151 = vld [vmem:[%s0 + $0x18] sm:$0xf]
    %v152 = vld [vmem:[%s0 + $0x1c] sm:$0xf]
    %v153 = vld [vmem:[%s0 + $0x20] sm:$0xf]
    %v154 = vld [vmem:[%s0 + $0x24] sm:$0xf]
    %v155 = vld [vmem:[%s0 + $0x28] sm:$0xf]
    %v156 = vld [vmem:[%s0 + $0x2c] sm:$0xf]
    %v157 = vld [vmem:[%s0 + $0x30] sm:$0xf]
    %v158 = vld [vmem:[%s0 + $0x34] sm:$0xf]
    %v159 = vld [vmem:[%s0 + $0x38] sm:$0xf]
    %v160 = vld [vmem:[%s0 + $0x3c] sm:$0xf]
    %v161 = vld [vmem:[%s0 + $0x40] sm:$0xf]
    %v162 = vld [vmem:[%s0 + $0x44] sm:$0xf]
    %v163 = vld [vmem:[%s0 + $0x48] sm:$0xf]
    %v164 = vld [vmem:[%s0 + $0x4c] sm:$0xf]
    %v165 = vld [vmem:[%s0 + $0x50] sm:$0xf]
    %v166 = vld [vmem:[%s0 + $0x54] sm:$0xf]
    %v167 = vld [vmem:[%s0 + $0x58] sm:$0xf]
    %v168 = vld [vmem:[%s0 + $0x5c] sm:$0xf]
    %v169 = vld [vmem:[%s0 + $0x60] sm:$0xf]
    %v170 = vld [vmem:[%s0 + $0x64] sm:$0xf]
    %v171 = vld [vmem:[%s0 + $0x68] sm:$0xf]
    %v172 = vld [vmem:[%s0 + $0x6c] sm:$0xf]
    %v173 = vld [vmem:[%s0 + $0x70] sm:$0xf]
    %v174 = vld [vmem:[%s0 + $0x74] sm:$0xf]
    %v175 = vld [vmem:[%s0 + $0x78] sm:$0xf]
    %v176 = vld [vmem:[%s0 + $0x7c] sm:$0xf]
    %v177 = vld [vmem:[%s0 + $0x80] sm:$0xf]
    %v178 = vld [vmem:[%s0 + $0x84] sm:$0xf]
    %v179 = vld [vmem:[%s0 + $0x88] sm:$0xf]
    %v180 = vld [vmem:[%s0 + $0x8c] sm:$0xf]
    %v181 = vld [vmem:[%s0 + $0x90] sm:$0xf]
    %v182 = vld [vmem:[%s0 + $0x94] sm:$0xf]
    %v183 = vld [vmem:[%s0 + $0x98] sm:$0xf]
    %v184 = vld [vmem:[%s0 + $0x9c] sm:$0xf]
    %v185 = vld [vmem:[%s0 + $0xa0] sm:$0xf]
    %v186 = vld [vmem:[%s0 + $0xa4] sm:$0xf]
    %v187 = vld [vmem:[%s0 + $0xa8] sm:$0xf]
    %v188 = vld [vmem:[%s0 + $0xac] sm:$0xf]
    %v189 = vld [vmem:[%s0 + $0xb0] sm:$0xf]
    %v190 = vld [vmem:[%s0 + $0xb4] sm:$0xf]
    %v191 = vld [vmem:[%s0 + $0xb8] sm:$0xf]
    %v192 = vld [vmem:[%s0 + $0xbc] sm:$0xf]
    %v193 = vld [vmem:[%s0 + $0xc0] sm:$0xf]
    %v194 = vld [vmem:[%s0 + $0xc4] sm:$0xf]
    %v195 = vld [vmem:[%s0 + $0xc8] sm:$0xf]
    %v196 = vld [vmem:[%s0 + $0xcc] sm:$0xf]
    %v197 = vld [vmem:[%s0 + $0xd0] sm:$0xf]
    %v198 = vld [vmem:[%s0 + $0xd4] sm:$0xf]
    %v199 = vld [vmem:[%s0 + $0xd8] sm:$0xf]
    %v200 = vld [vmem:[%s0 + $0xdc] sm:$0xf]
    %v201 = vld [vmem:[%s0 + $0xe0] sm:$0xf]
    %v202 = vld [vmem:[%s0 + $0xe4] sm:$0xf]
    %v203 = vld [vmem:[%s0 + $0xe8] sm:$0xf]
    %v204 = vld [vmem:[%s0 + $0xec] sm:$0xf]
    %v205 = vld [vmem:[%s0 + $0xf0] sm:$0xf]
    %v206 = vld [vmem:[%s0 + $0xf4] sm:$0xf]
    %v207 = vld [vmem:[%s0 + $0xf8] sm:$0xf]
    %v208 = vld [vmem:[%s0 + $0xfc] sm:$0xf]
    %v209 = vunpack.c.l.bf16 %v145
    %v210 = vunpack.c.l.bf16 %v146
    %v211 = vunpack.c.l.bf16 %v147
    %v212 = vunpack.c.l.bf16 %v148
    %v213 = vunpack.c.l.bf16 %v149
    %v214 = vunpack.c.l.bf16 %v150
    %v215 = vunpack.c.l.bf16 %v151
    %v216 = vunpack.c.l.bf16 %v152
    %v217 = vunpack.c.l.bf16 %v153
    %v218 = vunpack.c.l.bf16 %v154
    %v219 = vunpack.c.l.bf16 %v155
    %v220 = vunpack.c.l.bf16 %v156
    %v221 = vunpack.c.l.bf16 %v157
    %v222 = vunpack.c.l.bf16 %v158
    %v223 = vunpack.c.l.bf16 %v159
    %v224 = vunpack.c.l.bf16 %v160
    %v225 = vunpack.c.l.bf16 %v161
    %v226 = vunpack.c.l.bf16 %v162
    %v227 = vunpack.c.l.bf16 %v163
    %v228 = vunpack.c.l.bf16 %v164
    %v229 = vunpack.c.l.bf16 %v165
    %v230 = vunpack.c.l.bf16 %v166
    %v231 = vunpack.c.l.bf16 %v167
    %v232 = vunpack.c.l.bf16 %v168
    %v233 = vunpack.c.l.bf16 %v169
    %v234 = vunpack.c.l.bf16 %v170
    %v235 = vunpack.c.l.bf16 %v171
    %v236 = vunpack.c.l.bf16 %v172
    %v237 = vunpack.c.l.bf16 %v173
    %v238 = vunpack.c.l.bf16 %v174
    %v239 = vunpack.c.l.bf16 %v175
    %v240 = vunpack.c.l.bf16 %v176
    %v241 = vunpack.c.l.bf16 %v177
    %v242 = vunpack.c.l.bf16 %v178
    %v243 = vunpack.c.l.bf16 %v179
    %v244 = vunpack.c.l.bf16 %v180
    %v245 = vunpack.c.l.bf16 %v181
    %v246 = vunpack.c.l.bf16 %v182
    %v247 = vunpack.c.l.bf16 %v183
    %v248 = vunpack.c.l.bf16 %v184
    %v249 = vunpack.c.l.bf16 %v185
    %v250 = vunpack.c.l.bf16 %v186
    %v251 = vunpack.c.l.bf16 %v187
    %v252 = vunpack.c.l.bf16 %v188
    %v253 = vunpack.c.l.bf16 %v189
    %v254 = vunpack.c.l.bf16 %v190
    %v255 = vunpack.c.l.bf16 %v191
    %v256 = vunpack.c.l.bf16 %v192
    %v257 = vunpack.c.l.bf16 %v193
    %v258 = vunpack.c.l.bf16 %v194
    %v259 = vunpack.c.l.bf16 %v195
    %v260 = vunpack.c.l.bf16 %v196
    %v261 = vunpack.c.l.bf16 %v197
    %v262 = vunpack.c.l.bf16 %v198
    %v263 = vunpack.c.l.bf16 %v199
    %v264 = vunpack.c.l.bf16 %v200
    %v265 = vunpack.c.l.bf16 %v201
    %v266 = vunpack.c.l.bf16 %v202
    %v267 = vunpack.c.l.bf16 %v203
    %v268 = vunpack.c.l.bf16 %v204
    %v269 = vunpack.c.l.bf16 %v205
    %v270 = vunpack.c.l.bf16 %v206
    %v271 = vunpack.c.l.bf16 %v207
    %v272 = vunpack.c.l.bf16 %v208
    %v273 = vld [vmem:[%s1] sm:$0xff]
    %v274 = vld [vmem:[%s1 + $0x8] sm:$0xff]
    %v275 = vld [vmem:[%s1 + $0x10] sm:$0xff]
    %v276 = vld [vmem:[%s1 + $0x18] sm:$0xff]
    %v277 = vld [vmem:[%s1 + $0x20] sm:$0xff]
    %v278 = vld [vmem:[%s1 + $0x28] sm:$0xff]
    %v279 = vld [vmem:[%s1 + $0x30] sm:$0xff]
    %v280 = vld [vmem:[%s1 + $0x38] sm:$0xff]
    %v281 = vld [vmem:[%s1 + $0x40] sm:$0xff]
    %v282 = vld [vmem:[%s1 + $0x48] sm:$0xff]
    %v283 = vld [vmem:[%s1 + $0x50] sm:$0xff]
    %v284 = vld [vmem:[%s1 + $0x58] sm:$0xff]
    %v285 = vld [vmem:[%s1 + $0x60] sm:$0xff]
    %v286 = vld [vmem:[%s1 + $0x68] sm:$0xff]
    %v287 = vld [vmem:[%s1 + $0x70] sm:$0xff]
    %v288 = vld [vmem:[%s1 + $0x78] sm:$0xff]
    %v289 = vld [vmem:[%s1 + $0x80] sm:$0xff]
    %v290 = vld [vmem:[%s1 + $0x88] sm:$0xff]
    %v291 = vld [vmem:[%s1 + $0x90] sm:$0xff]
    %v292 = vld [vmem:[%s1 + $0x98] sm:$0xff]
    %v293 = vld [vmem:[%s1 + $0xa0] sm:$0xff]
    %v294 = vld [vmem:[%s1 + $0xa8] sm:$0xff]
    %v295 = vld [vmem:[%s1 + $0xb0] sm:$0xff]
    %v296 = vld [vmem:[%s1 + $0xb8] sm:$0xff]
    %v297 = vld [vmem:[%s1 + $0xc0] sm:$0xff]
    %v298 = vld [vmem:[%s1 + $0xc8] sm:$0xff]
    %v299 = vld [vmem:[%s1 + $0xd0] sm:$0xff]
    %v300 = vld [vmem:[%s1 + $0xd8] sm:$0xff]
    %v301 = vld [vmem:[%s1 + $0xe0] sm:$0xff]
    %v302 = vld [vmem:[%s1 + $0xe8] sm:$0xff]
    %v303 = vld [vmem:[%s1 + $0xf0] sm:$0xff]
    %v304 = vld [vmem:[%s1 + $0xf8] sm:$0xff]
    %v305 = vmul.f32 %v209, %v273
    %v306 = vmul.f32 %v210, %v274
    %v307 = vmul.f32 %v211, %v275
    %v308 = vmul.f32 %v212, %v276
    %v309 = vmul.f32 %v213, %v277
    %v310 = vmul.f32 %v214, %v278
    %v311 = vmul.f32 %v215, %v279
    %v312 = vmul.f32 %v216, %v280
    %v313 = vmul.f32 %v217, %v281
    %v314 = vmul.f32 %v218, %v282
    %v315 = vmul.f32 %v219, %v283
    %v316 = vmul.f32 %v220, %v284
    %v317 = vmul.f32 %v221, %v285
    %v318 = vmul.f32 %v222, %v286
    %v319 = vmul.f32 %v223, %v287
    %v320 = vmul.f32 %v224, %v288
    %v321 = vmul.f32 %v225, %v289
    %v322 = vmul.f32 %v226, %v290
    %v323 = vmul.f32 %v227, %v291
    %v324 = vmul.f32 %v228, %v292
    %v325 = vmul.f32 %v229, %v293
    %v326 = vmul.f32 %v230, %v294
    %v327 = vmul.f32 %v231, %v295
    %v328 = vmul.f32 %v232, %v296
    %v329 = vmul.f32 %v233, %v297
    %v330 = vmul.f32 %v234, %v298
    %v331 = vmul.f32 %v235, %v299
    %v332 = vmul.f32 %v236, %v300
    %v333 = vmul.f32 %v237, %v301
    %v334 = vmul.f32 %v238, %v302
    %v335 = vmul.f32 %v239, %v303
    %v336 = vmul.f32 %v240, %v304
    %v337 = vmul.f32 %v241, %v273
    %v338 = vmul.f32 %v242, %v274
    %v339 = vmul.f32 %v243, %v275
    %v340 = vmul.f32 %v244, %v276
    %v341 = vmul.f32 %v245, %v277
    %v342 = vmul.f32 %v246, %v278
    %v343 = vmul.f32 %v247, %v279
    %v344 = vmul.f32 %v248, %v280
    %v345 = vmul.f32 %v249, %v281
    %v346 = vmul.f32 %v250, %v282
    %v347 = vmul.f32 %v251, %v283
    %v348 = vmul.f32 %v252, %v284
    %v349 = vmul.f32 %v253, %v285
    %v350 = vmul.f32 %v254, %v286
    %v351 = vmul.f32 %v255, %v287
    %v352 = vmul.f32 %v256, %v288
    %v353 = vmul.f32 %v257, %v289
    %v354 = vmul.f32 %v258, %v290
    %v355 = vmul.f32 %v259, %v291
    %v356 = vmul.f32 %v260, %v292
    %v357 = vmul.f32 %v261, %v293
    %v358 = vmul.f32 %v262, %v294
    %v359 = vmul.f32 %v263, %v295
    %v360 = vmul.f32 %v264, %v296
    %v361 = vmul.f32 %v265, %v297
    %v362 = vmul.f32 %v266, %v298
    %v363 = vmul.f32 %v267, %v299
    %v364 = vmul.f32 %v268, %v300
    %v365 = vmul.f32 %v269, %v301
    %v366 = vmul.f32 %v270, %v302
    %v367 = vmul.f32 %v271, %v303
    %v368 = vmul.f32 %v272, %v304
    %v369 = vadd.f32 %v81, %v305
    %v370 = vadd.f32 %v82, %v306
    %v371 = vadd.f32 %v83, %v307
    %v372 = vadd.f32 %v84, %v308
    %v373 = vadd.f32 %v85, %v309
    %v374 = vadd.f32 %v86, %v310
    %v375 = vadd.f32 %v87, %v311
    %v376 = vadd.f32 %v88, %v312
    %v377 = vadd.f32 %v89, %v313
    %v378 = vadd.f32 %v90, %v314
    %v379 = vadd.f32 %v91, %v315
    %v380 = vadd.f32 %v92, %v316
    %v381 = vadd.f32 %v93, %v317
    %v382 = vadd.f32 %v94, %v318
    %v383 = vadd.f32 %v95, %v319
    %v384 = vadd.f32 %v96, %v320
    %v385 = vadd.f32 %v97, %v321
    %v386 = vadd.f32 %v98, %v322
    %v387 = vadd.f32 %v99, %v323
    %v388 = vadd.f32 %v100, %v324
    %v389 = vadd.f32 %v101, %v325
    %v390 = vadd.f32 %v102, %v326
    %v391 = vadd.f32 %v103, %v327
    %v392 = vadd.f32 %v104, %v328
    %v393 = vadd.f32 %v105, %v329
    %v394 = vadd.f32 %v106, %v330
    %v395 = vadd.f32 %v107, %v331
    %v396 = vadd.f32 %v108, %v332
    %v397 = vadd.f32 %v109, %v333
    %v398 = vadd.f32 %v110, %v334
    %v399 = vadd.f32 %v111, %v335
    %v400 = vadd.f32 %v112, %v336
    %v401 = vadd.f32 %v113, %v337
    %v402 = vadd.f32 %v114, %v338
    %v403 = vadd.f32 %v115, %v339
    %v404 = vadd.f32 %v116, %v340
    %v405 = vadd.f32 %v117, %v341
    %v406 = vadd.f32 %v118, %v342
    %v407 = vadd.f32 %v119, %v343
    %v408 = vadd.f32 %v120, %v344
    %v409 = vadd.f32 %v121, %v345
    %v410 = vadd.f32 %v122, %v346
    %v411 = vadd.f32 %v123, %v347
    %v412 = vadd.f32 %v124, %v348
    %v413 = vadd.f32 %v125, %v349
    %v414 = vadd.f32 %v126, %v350
    %v415 = vadd.f32 %v127, %v351
    %v416 = vadd.f32 %v128, %v352
    %v417 = vadd.f32 %v129, %v353
    %v418 = vadd.f32 %v130, %v354
    %v419 = vadd.f32 %v131, %v355
    %v420 = vadd.f32 %v132, %v356
    %v421 = vadd.f32 %v133, %v357
    %v422 = vadd.f32 %v134, %v358
    %v423 = vadd.f32 %v135, %v359
    %v424 = vadd.f32 %v136, %v360
    %v425 = vadd.f32 %v137, %v361
    %v426 = vadd.f32 %v138, %v362
    %v427 = vadd.f32 %v139, %v363
    %v428 = vadd.f32 %v140, %v364
    %v429 = vadd.f32 %v141, %v365
    %v430 = vadd.f32 %v142, %v366
    %v431 = vadd.f32 %v143, %v367
    %v432 = vadd.f32 %v144, %v368
    %vm433 = vcmask 31744
    %434 = vst.msk [vmem:[#allocation2] sm:$0xff] %vm433, %v369
    %435 = vst.msk [vmem:[#allocation2 + $0x8] sm:$0xff] %vm433, %v370
    %436 = vst.msk [vmem:[#allocation2 + $0x10] sm:$0xff] %vm433, %v371
    %437 = vst.msk [vmem:[#allocation2 + $0x18] sm:$0xff] %vm433, %v372
    %438 = vst.msk [vmem:[#allocation2 + $0x20] sm:$0xff] %vm433, %v373
    %439 = vst.msk [vmem:[#allocation2 + $0x28] sm:$0xff] %vm433, %v374
    %440 = vst.msk [vmem:[#allocation2 + $0x30] sm:$0xff] %vm433, %v375
    %441 = vst.msk [vmem:[#allocation2 + $0x38] sm:$0xff] %vm433, %v376
    %442 = vst.msk [vmem:[#allocation2 + $0x40] sm:$0xff] %vm433, %v377
    %443 = vst.msk [vmem:[#allocation2 + $0x48] sm:$0xff] %vm433, %v378
    %444 = vst.msk [vmem:[#allocation2 + $0x50] sm:$0xff] %vm433, %v379
    %445 = vst.msk [vmem:[#allocation2 + $0x58] sm:$0xff] %vm433, %v380
    %446 = vst.msk [vmem:[#allocation2 + $0x60] sm:$0xff] %vm433, %v381
    %447 = vst.msk [vmem:[#allocation2 + $0x68] sm:$0xff] %vm433, %v382
    %448 = vst.msk [vmem:[#allocation2 + $0x70] sm:$0xff] %vm433, %v383
    %449 = vst.msk [vmem:[#allocation2 + $0x78] sm:$0xff] %vm433, %v384
    %450 = vst.msk [vmem:[#allocation2 + $0x80] sm:$0xff] %vm433, %v385
    %451 = vst.msk [vmem:[#allocation2 + $0x88] sm:$0xff] %vm433, %v386
    %452 = vst.msk [vmem:[#allocation2 + $0x90] sm:$0xff] %vm433, %v387
    %453 = vst.msk [vmem:[#allocation2 + $0x98] sm:$0xff] %vm433, %v388
    %454 = vst.msk [vmem:[#allocation2 + $0xa0] sm:$0xff] %vm433, %v389
    %455 = vst.msk [vmem:[#allocation2 + $0xa8] sm:$0xff] %vm433, %v390
    %456 = vst.msk [vmem:[#allocation2 + $0xb0] sm:$0xff] %vm433, %v391
    %457 = vst.msk [vmem:[#allocation2 + $0xb8] sm:$0xff] %vm433, %v392
    %458 = vst.msk [vmem:[#allocation2 + $0xc0] sm:$0xff] %vm433, %v393
    %459 = vst.msk [vmem:[#allocation2 + $0xc8] sm:$0xff] %vm433, %v394
    %460 = vst.msk [vmem:[#allocation2 + $0xd0] sm:$0xff] %vm433, %v395
    %461 = vst.msk [vmem:[#allocation2 + $0xd8] sm:$0xff] %vm433, %v396
    %462 = vst.msk [vmem:[#allocation2 + $0xe0] sm:$0xff] %vm433, %v397
    %463 = vst.msk [vmem:[#allocation2 + $0xe8] sm:$0xff] %vm433, %v398
    %464 = vst.msk [vmem:[#allocation2 + $0xf0] sm:$0xff] %vm433, %v399
    %465 = vst.msk [vmem:[#allocation2 + $0xf8] sm:$0xff] %vm433, %v400
    %466 = vst.msk [vmem:[#allocation2 + $0x100] sm:$0xff] %vm433, %v401
    %467 = vst.msk [vmem:[#allocation2 + $0x108] sm:$0xff] %vm433, %v402
    %468 = vst.msk [vmem:[#allocation2 + $0x110] sm:$0xff] %vm433, %v403
    %469 = vst.msk [vmem:[#allocation2 + $0x118] sm:$0xff] %vm433, %v404
    %470 = vst.msk [vmem:[#allocation2 + $0x120] sm:$0xff] %vm433, %v405
    %471 = vst.msk [vmem:[#allocation2 + $0x128] sm:$0xff] %vm433, %v406
    %472 = vst.msk [vmem:[#allocation2 + $0x130] sm:$0xff] %vm433, %v407
    %473 = vst.msk [vmem:[#allocation2 + $0x138] sm:$0xff] %vm433, %v408
    %474 = vst.msk [vmem:[#allocation2 + $0x140] sm:$0xff] %vm433, %v409
    %475 = vst.msk [vmem:[#allocation2 + $0x148] sm:$0xff] %vm433, %v410
    %476 = vst.msk [vmem:[#allocation2 + $0x150] sm:$0xff] %vm433, %v411
    %477 = vst.msk [vmem:[#allocation2 + $0x158] sm:$0xff] %vm433, %v412
    %478 = vst.msk [vmem:[#allocation2 + $0x160] sm:$0xff] %vm433, %v413
    %479 = vst.msk [vmem:[#allocation2 + $0x168] sm:$0xff] %vm433, %v414
    %480 = vst.msk [vmem:[#allocation2 + $0x170] sm:$0xff] %vm433, %v415
    %481 = vst.msk [vmem:[#allocation2 + $0x178] sm:$0xff] %vm433, %v416
    %482 = vst.msk [vmem:[#allocation2 + $0x180] sm:$0xff] %vm433, %v417
    %483 = vst.msk [vmem:[#allocation2 + $0x188] sm:$0xff] %vm433, %v418
    %484 = vst.msk [vmem:[#allocation2 + $0x190] sm:$0xff] %vm433, %v419
    %485 = vst.msk [vmem:[#allocation2 + $0x198] sm:$0xff] %vm433, %v420
    %486 = vst.msk [vmem:[#allocation2 + $0x1a0] sm:$0xff] %vm433, %v421
    %487 = vst.msk [vmem:[#allocation2 + $0x1a8] sm:$0xff] %vm433, %v422
    %488 = vst.msk [vmem:[#allocation2 + $0x1b0] sm:$0xff] %vm433, %v423
    %489 = vst.msk [vmem:[#allocation2 + $0x1b8] sm:$0xff] %vm433, %v424
    %490 = vst.msk [vmem:[#allocation2 + $0x1c0] sm:$0xff] %vm433, %v425
    %491 = vst.msk [vmem:[#allocation2 + $0x1c8] sm:$0xff] %vm433, %v426
    %492 = vst.msk [vmem:[#allocation2 + $0x1d0] sm:$0xff] %vm433, %v427
    %493 = vst.msk [vmem:[#allocation2 + $0x1d8] sm:$0xff] %vm433, %v428
    %494 = vst.msk [vmem:[#allocation2 + $0x1e0] sm:$0xff] %vm433, %v429
    %495 = vst.msk [vmem:[#allocation2 + $0x1e8] sm:$0xff] %vm433, %v430
    %496 = vst.msk [vmem:[#allocation2 + $0x1f0] sm:$0xff] %vm433, %v431
    %497 = vst.msk [vmem:[#allocation2 + $0x1f8] sm:$0xff] %vm433, %v432
    // Predicated region
    $region14: #{tpu_custom_call.1} parent=1 // pred_check
      %p498 = pneg %p12
    $region15: #{tpu_custom_call.1} parent=1 // pred_check_branch
      %500 = sbr.rel (%p498) target = $region17
    $region16: #{tpu_custom_call.1} parent=1 // pred_region
      %v501 = vld [vmem:[#allocation2] sm:$0xff]
      %v502 = vld [vmem:[#allocation2 + $0x8] sm:$0xff]
      %v503 = vld [vmem:[#allocation2 + $0x10] sm:$0xff]
      %v504 = vld [vmem:[#allocation2 + $0x18] sm:$0xff]
      %v505 = vld [vmem:[#allocation2 + $0x20] sm:$0xff]
      %v506 = vld [vmem:[#allocation2 + $0x28] sm:$0xff]
      %v507 = vld [vmem:[#allocation2 + $0x30] sm:$0xff]
      %v508 = vld [vmem:[#allocation2 + $0x38] sm:$0xff]
      %v509 = vld [vmem:[#allocation2 + $0x40] sm:$0xff]
      %v510 = vld [vmem:[#allocation2 + $0x48] sm:$0xff]
      %v511 = vld [vmem:[#allocation2 + $0x50] sm:$0xff]
      %v512 = vld [vmem:[#allocation2 + $0x58] sm:$0xff]
      %v513 = vld [vmem:[#allocation2 + $0x60] sm:$0xff]
      %v514 = vld [vmem:[#allocation2 + $0x68] sm:$0xff]
      %v515 = vld [vmem:[#allocation2 + $0x70] sm:$0xff]
      %v516 = vld [vmem:[#allocation2 + $0x78] sm:$0xff]
      %v517 = vld [vmem:[#allocation2 + $0x80] sm:$0xff]
      %v518 = vld [vmem:[#allocation2 + $0x88] sm:$0xff]
      %v519 = vld [vmem:[#allocation2 + $0x90] sm:$0xff]
      %v520 = vld [vmem:[#allocation2 + $0x98] sm:$0xff]
      %v521 = vld [vmem:[#allocation2 + $0xa0] sm:$0xff]
      %v522 = vld [vmem:[#allocation2 + $0xa8] sm:$0xff]
      %v523 = vld [vmem:[#allocation2 + $0xb0] sm:$0xff]
      %v524 = vld [vmem:[#allocation2 + $0xb8] sm:$0xff]
      %v525 = vld [vmem:[#allocation2 + $0xc0] sm:$0xff]
      %v526 = vld [vmem:[#allocation2 + $0xc8] sm:$0xff]
      %v527 = vld [vmem:[#allocation2 + $0xd0] sm:$0xff]
      %v528 = vld [vmem:[#allocation2 + $0xd8] sm:$0xff]
      %v529 = vld [vmem:[#allocation2 + $0xe0] sm:$0xff]
      %v530 = vld [vmem:[#allocation2 + $0xe8] sm:$0xff]
      %v531 = vld [vmem:[#allocation2 + $0xf0] sm:$0xff]
      %v532 = vld [vmem:[#allocation2 + $0xf8] sm:$0xff]
      %v533 = vld [vmem:[#allocation2 + $0x100] sm:$0xff]
      %v534 = vld [vmem:[#allocation2 + $0x108] sm:$0xff]
      %v535 = vld [vmem:[#allocation2 + $0x110] sm:$0xff]
      %v536 = vld [vmem:[#allocation2 + $0x118] sm:$0xff]
      %v537 = vld [vmem:[#allocation2 + $0x120] sm:$0xff]
      %v538 = vld [vmem:[#allocation2 + $0x128] sm:$0xff]
      %v539 = vld [vmem:[#allocation2 + $0x130] sm:$0xff]
      %v540 = vld [vmem:[#allocation2 + $0x138] sm:$0xff]
      %v541 = vld [vmem:[#allocation2 + $0x140] sm:$0xff]
      %v542 = vld [vmem:[#allocation2 + $0x148] sm:$0xff]
      %v543 = vld [vmem:[#allocation2 + $0x150] sm:$0xff]
      %v544 = vld [vmem:[#allocation2 + $0x158] sm:$0xff]
      %v545 = vld [vmem:[#allocation2 + $0x160] sm:$0xff]
      %v546 = vld [vmem:[#allocation2 + $0x168] sm:$0xff]
      %v547 = vld [vmem:[#allocation2 + $0x170] sm:$0xff]
      %v548 = vld [vmem:[#allocation2 + $0x178] sm:$0xff]
      %v549 = vld [vmem:[#allocation2 + $0x180] sm:$0xff]
      %v550 = vld [vmem:[#allocation2 + $0x188] sm:$0xff]
      %v551 = vld [vmem:[#allocation2 + $0x190] sm:$0xff]
      %v552 = vld [vmem:[#allocation2 + $0x198] sm:$0xff]
      %v553 = vld [vmem:[#allocation2 + $0x1a0] sm:$0xff]
      %v554 = vld [vmem:[#allocation2 + $0x1a8] sm:$0xff]
      %v555 = vld [vmem:[#allocation2 + $0x1b0] sm:$0xff]
      %v556 = vld [vmem:[#allocation2 + $0x1b8] sm:$0xff]
      %v557 = vld [vmem:[#allocation2 + $0x1c0] sm:$0xff]
      %v558 = vld [vmem:[#allocation2 + $0x1c8] sm:$0xff]
      %v559 = vld [vmem:[#allocation2 + $0x1d0] sm:$0xff]
      %v560 = vld [vmem:[#allocation2 + $0x1d8] sm:$0xff]
      %v561 = vld [vmem:[#allocation2 + $0x1e0] sm:$0xff]
      %v562 = vld [vmem:[#allocation2 + $0x1e8] sm:$0xff]
      %v563 = vld [vmem:[#allocation2 + $0x1f0] sm:$0xff]
      %v564 = vld [vmem:[#allocation2 + $0x1f8] sm:$0xff]
      %v565 = vsel %vm433, %v501, 0.0
      %v566 = vsel %vm433, %v502, 0.0
      %v567 = vadd.f32 %v565, %v566
      %v568 = vsel %vm433, %v503, 0.0
      %v569 = vadd.f32 %v567, %v568
      %v570 = vsel %vm433, %v504, 0.0
      %v571 = vadd.f32 %v569, %v570
      %v572 = vsel %vm433, %v505, 0.0
      %v573 = vadd.f32 %v571, %v572
      %v574 = vsel %vm433, %v506, 0.0
      %v575 = vadd.f32 %v573, %v574
      %v576 = vsel %vm433, %v507, 0.0
      %v577 = vadd.f32 %v575, %v576
      %v578 = vsel %vm433, %v508, 0.0
      %v579 = vadd.f32 %v577, %v578
      %v580 = vsel %vm433, %v509, 0.0
      %v581 = vadd.f32 %v579, %v580
      %v582 = vsel %vm433, %v510, 0.0
      %v583 = vadd.f32 %v581, %v582
      %v584 = vsel %vm433, %v511, 0.0
      %v585 = vadd.f32 %v583, %v584
      %v586 = vsel %vm433, %v512, 0.0
      %v587 = vadd.f32 %v585, %v586
      %v588 = vsel %vm433, %v513, 0.0
      %v589 = vadd.f32 %v587, %v588
      %v590 = vsel %vm433, %v514, 0.0
      %v591 = vadd.f32 %v589, %v590
      %v592 = vsel %vm433, %v515, 0.0
      %v593 = vadd.f32 %v591, %v592
      %v594 = vsel %vm433, %v516, 0.0
      %v595 = vadd.f32 %v593, %v594
      %v596 = vsel %vm433, %v517, 0.0
      %v597 = vadd.f32 %v595, %v596
      %v598 = vsel %vm433, %v518, 0.0
      %v599 = vadd.f32 %v597, %v598
      %v600 = vsel %vm433, %v519, 0.0
      %v601 = vadd.f32 %v599, %v600
      %v602 = vsel %vm433, %v520, 0.0
      %v603 = vadd.f32 %v601, %v602
      %v604 = vsel %vm433, %v521, 0.0
      %v605 = vadd.f32 %v603, %v604
      %v606 = vsel %vm433, %v522, 0.0
      %v607 = vadd.f32 %v605, %v606
      %v608 = vsel %vm433, %v523, 0.0
      %v609 = vadd.f32 %v607, %v608
      %v610 = vsel %vm433, %v524, 0.0
      %v611 = vadd.f32 %v609, %v610
      %v612 = vsel %vm433, %v525, 0.0
      %v613 = vadd.f32 %v611, %v612
      %v614 = vsel %vm433, %v526, 0.0
      %v615 = vadd.f32 %v613, %v614
      %v616 = vsel %vm433, %v527, 0.0
      %v617 = vadd.f32 %v615, %v616
      %v618 = vsel %vm433, %v528, 0.0
      %v619 = vadd.f32 %v617, %v618
      %v620 = vsel %vm433, %v529, 0.0
      %v621 = vadd.f32 %v619, %v620
      %v622 = vsel %vm433, %v530, 0.0
      %v623 = vadd.f32 %v621, %v622
      %v624 = vsel %vm433, %v531, 0.0
      %v625 = vadd.f32 %v623, %v624
      %v626 = vsel %vm433, %v532, 0.0
      %v627 = vadd.f32 %v625, %v626
      %v628 = vrot.slane %v627, 4
      %v629 = vadd.f32 %v627, %v628
      %v630 = vrot.slane %v629, 2
      %v631 = vadd.f32 %v629, %v630
      %v632 = vrot.slane %v631, 1
      %v633 = vadd.f32 %v631, %v632
      %v634 = vsel %vm433, %v533, 0.0
      %v635 = vsel %vm433, %v534, 0.0
      %v636 = vadd.f32 %v634, %v635
      %v637 = vsel %vm433, %v535, 0.0
      %v638 = vadd.f32 %v636, %v637
      %v639 = vsel %vm433, %v536, 0.0
      %v640 = vadd.f32 %v638, %v639
      %v641 = vsel %vm433, %v537, 0.0
      %v642 = vadd.f32 %v640, %v641
      %v643 = vsel %vm433, %v538, 0.0
      %v644 = vadd.f32 %v642, %v643
      %v645 = vsel %vm433, %v539, 0.0
      %v646 = vadd.f32 %v644, %v645
      %v647 = vsel %vm433, %v540, 0.0
      %v648 = vadd.f32 %v646, %v647
      %v649 = vsel %vm433, %v541, 0.0
      %v650 = vadd.f32 %v648, %v649
      %v651 = vsel %vm433, %v542, 0.0
      %v652 = vadd.f32 %v650, %v651
      %v653 = vsel %vm433, %v543, 0.0
      %v654 = vadd.f32 %v652, %v653
      %v655 = vsel %vm433, %v544, 0.0
      %v656 = vadd.f32 %v654, %v655
      %v657 = vsel %vm433, %v545, 0.0
      %v658 = vadd.f32 %v656, %v657
      %v659 = vsel %vm433, %v546, 0.0
      %v660 = vadd.f32 %v658, %v659
      %v661 = vsel %vm433, %v547, 0.0
      %v662 = vadd.f32 %v660, %v661
      %v663 = vsel %vm433, %v548, 0.0
      %v664 = vadd.f32 %v662, %v663
      %v665 = vsel %vm433, %v549, 0.0
      %v666 = vadd.f32 %v664, %v665
      %v667 = vsel %vm433, %v550, 0.0
      %v668 = vadd.f32 %v666, %v667
      %v669 = vsel %vm433, %v551, 0.0
      %v670 = vadd.f32 %v668, %v669
      %v671 = vsel %vm433, %v552, 0.0
      %v672 = vadd.f32 %v670, %v671
      %v673 = vsel %vm433, %v553, 0.0
      %v674 = vadd.f32 %v672, %v673
      %v675 = vsel %vm433, %v554, 0.0
      %v676 = vadd.f32 %v674, %v675
      %v677 = vsel %vm433, %v555, 0.0
      %v678 = vadd.f32 %v676, %v677
      %v679 = vsel %vm433, %v556, 0.0
      %v680 = vadd.f32 %v678, %v679
      %v681 = vsel %vm433, %v557, 0.0
      %v682 = vadd.f32 %v680, %v681
      %v683 = vsel %vm433, %v558, 0.0
      %v684 = vadd.f32 %v682, %v683
      %v685 = vsel %vm433, %v559, 0.0
      %v686 = vadd.f32 %v684, %v685
      %v687 = vsel %vm433, %v560, 0.0
      %v688 = vadd.f32 %v686, %v687
      %v689 = vsel %vm433, %v561, 0.0
      %v690 = vadd.f32 %v688, %v689
      %v691 = vsel %vm433, %v562, 0.0
      %v692 = vadd.f32 %v690, %v691
      %v693 = vsel %vm433, %v563, 0.0
      %v694 = vadd.f32 %v692, %v693
      %v695 = vsel %vm433, %v564, 0.0
      %v696 = vadd.f32 %v694, %v695
      %v697 = vrot.slane %v696, 4
      %v698 = vadd.f32 %v696, %v697
      %v699 = vrot.slane %v698, 2
      %v700 = vadd.f32 %v698, %v699
      %v701 = vrot.slane %v700, 1
      %v702 = vadd.f32 %v700, %v701
      %vm705 = vcmask 1041409
      %v706 = vsel %vm705, %v702, %v633
      %vm708 = vcmask 25600
      %709 = vst.msk [vmem:[#allocation3] sm:$0x3] %vm708, %v706
    $region17: #{tpu_custom_call.1} parent=1 // pred_fallthru
      _
    // Predicated region
    $region18: #{tpu_custom_call.1} parent=1 // pred_check
      _
    $region19: #{tpu_custom_call.1} parent=1 // pred_check_branch
      %711 = sbr.rel (0) target = $region21
    $region20: #{tpu_custom_call.1} parent=1 // pred_region
      %s713 = ssub.s32 32, 32
      %714 = vsyncadd [#allocation4], %s713
      %s716 = sshll.u32 [#allocation3], 4
      %s717 = int_to_ptr.vmem [resolvable:$true] %s716
      %719 = dma.vmem_to_hbm [thread:$0]  %s717, 32, %s2, [#allocation4]
    $region21: #{tpu_custom_call.1} parent=1 // pred_fallthru
      _
    // Predicated region
    $region22: #{tpu_custom_call.1} parent=1 // pred_check
      _
    $region23: #{tpu_custom_call.1} parent=1 // pred_check_branch
      %721 = sbr.rel (0) target = $region25
    $region24: #{tpu_custom_call.1} parent=1 // pred_region
      %722 = dma.done [#allocation4], 32
    $region25: #{tpu_custom_call.1} parent=1 // pred_fallthru
      _
    %723 = vsyncpa [#allocation4], 1

</llo_original>
